<compile_context>
chip_gen: v7x
topology: tpu7x:2x2x1
jax: 0.10.0
libtpu: 0.0.40
codegen_flags: <defaults>
</compile_context>

<pallas_src>
import math

import jax
import jax.numpy as jnp
import numpy as np
from jax.experimental import pallas as pl
from jax.experimental.pallas import tpu as pltpu


# ---------------------------------------------------------------------------
# Pallas kernel: circular Conv1d(k=3) as one fused im2col matmul + (PE + bias).
# ---------------------------------------------------------------------------
def _data_embedding_kernel(x_ref, w_ref, peb_ref, o_ref, taps_ref):
    # x_ref:    (b_blk, C, L)        input block, PyTorch NCL layout
    # w_ref:    (D, 3*C_pad)         fused conv weight (tap-major, channel-padded)
    # peb_ref:  (D, L)               positional embedding with conv bias folded in
    # o_ref:    (b_blk, D, L)        output block, PyTorch NCL layout
    # taps_ref: (3*C_pad, b_blk*L)   VMEM scratch: circular im2col slab
    b_blk, C, L = x_ref.shape
    C_pad = taps_ref.shape[0] // 3
    n_cols = taps_ref.shape[1]

    # Keep the channel-padding rows of the slab at zero (their weight columns are zero,
    # but 0 * uninitialized-NaN would still poison the accumulator).  Done every grid
    # step so it is also safe under megacore grid sharding (per-core scratch).
    if C_pad != C:
        pad_zeros = jnp.zeros((C_pad - C, n_cols), dtype=taps_ref.dtype)
        for t in range(3):
            taps_ref[t * C_pad + C:(t + 1) * C_pad, :] = pad_zeros

    # Circular im2col.  Within column block b:
    #   rows [0:C]               <- x[b][:, (l-1) mod L]   (tap k=0)
    #   rows [C_pad:C_pad+C]     <- x[b][:, l]             (tap k=1)
    #   rows [2C_pad:2C_pad+C]   <- x[b][:, (l+1) mod L]   (tap k=2)
    # pltpu.roll matches jnp.roll; only non-negative shifts are used.
    s_prev = 1 % L
    s_next = (L - 1) % L
    for b in range(b_blk):                               # b_blk is small and static
        x = x_ref[b]                                     # (C, L)
        taps_ref[0:C, b * L:(b + 1) * L] = pltpu.roll(x, shift=s_prev, axis=1)
        taps_ref[C_pad:C_pad + C, b * L:(b + 1) * L] = x
        taps_ref[2 * C_pad:2 * C_pad + C, b * L:(b + 1) * L] = pltpu.roll(
            x, shift=s_next, axis=1)

    # Single fused MXU dot for the whole batch block: (D, 3C_pad) @ (3C_pad, b_blk*L).
    acc = jnp.dot(w_ref[...], taps_ref[...], preferred_element_type=jnp.float32)

    # Positional embedding + conv bias (pre-folded).  Dropout: eval-mode identity.
    # TODO(synk): train-mode Dropout (RNG masking) is intentionally not implemented.
    peb = peb_ref[...]                                   # (D, L), f32, hoisted
    for b in range(b_blk):
        o_ref[b] = (acc[:, b * L:(b + 1) * L] + peb).astype(o_ref.dtype)


def _round_up(n, m):
    return ((n + m - 1) // m) * m


def data_embedding(x_ncl, weight, bias, pe_full, *, compute_dtype=jnp.float32):
    """DataEmbedding.forward (eval mode).

    x_ncl:   (B, c_in, L) -- PyTorch Conv1d NCL layout.
    weight:  (d_model, c_in, 3)   -- Conv1d weight.
    bias:    (d_model,)           -- Conv1d bias.
    pe_full: (max_len, d_model)   -- positional-embedding table.
    compute_dtype: dtype of the MXU operands (bf16 halves input HBM traffic on
                   v6e/v7x; accumulation stays f32 either way).
    Returns (B, d_model, L), same layout/dtype as the nn.Module output.
    """
    B, C, L = x_ncl.shape
    D = weight.shape[0]
    assert weight.shape == (D, C, 3), weight.shape
    assert L <= pe_full.shape[0], "seq_len exceeds positional-embedding max_len"

    out_dtype = x_ncl.dtype
    C_pad = _round_up(C, 8)          # sublane-align each tap block of the im2col slab

    # Tiny parameter-side prep (O(D*C_pad) and O(D*L); no pass over activations):
    # fuse the 3 conv taps along K (zero channel padding) and fold bias into the PE.
    w3 = jnp.transpose(weight, (0, 2, 1))                          # (D, 3, C)
    if C_pad != C:
        w3 = jnp.pad(w3, ((0, 0), (0, 0), (0, C_pad - C)))         # zero-padded taps
    w_fused = w3.reshape(D, 3 * C_pad).astype(compute_dtype)       # (D, 3*C_pad)
    pe_bias = (pe_full[:L, :].T + bias[:, None]).astype(jnp.float32)  # (D, L)
    x_in = x_ncl.astype(compute_dtype)

    # Batch-block size from a per-step VMEM budget: double-buffered input + output
    # blocks plus the (single-buffered) im2col scratch, ~20 MiB per step; aim for >=4
    # grid steps when B allows; b_blk always divides B (no padded garbage block).
    item_in = np.dtype(compute_dtype).itemsize
    item_out = np.dtype(out_dtype).itemsize
    per_row_bytes = (2 * C * L * item_in) + (2 * D * L * item_out) + (3 * C_pad * L * item_in)
    b_blk = max(1, min(B, (20 << 20) // max(per_row_bytes, 1)))
    b_blk = max(1, min(b_blk, pl.cdiv(B, 4)))
    while b_blk > 1 and B % b_blk:
        b_blk -= 1
    grid = (B // b_blk,)

    return pl.pallas_call(
        _data_embedding_kernel,
        out_shape=jax.ShapeDtypeStruct((B, D, L), out_dtype),
        grid=grid,
        in_specs=[
            pl.BlockSpec((b_blk, C, L), lambda g: (g, 0, 0)),
            pl.BlockSpec((D, 3 * C_pad), lambda g: (0, 0)),
            pl.BlockSpec((D, L), lambda g: (0, 0)),
        ],
        out_specs=pl.BlockSpec((b_blk, D, L), lambda g: (g, 0, 0)),
        scratch_shapes=[pltpu.VMEM((3 * C_pad, b_blk * L), compute_dtype)],
        compiler_params=pltpu.CompilerParams(
            dimension_semantics=("parallel",),
            vmem_limit_bytes=48 * 1024 * 1024,
        ),
    )(x_in, w_fused, pe_bias)


# ---------------------------------------------------------------------------
# Parameter / buffer construction (deterministic, matches module __init__ shapes)
# ---------------------------------------------------------------------------
def make_positional_embedding(d_model, max_len=256):
    position = jnp.arange(max_len, dtype=jnp.float32)[:, None]
    div_term = jnp.exp(
        jnp.arange(0, d_model, 2, dtype=jnp.float32) * (-math.log(10000.0) / d_model)
    )
    pe = jnp.zeros((max_len, d_model), dtype=jnp.float32)
    pe = pe.at[:, 0::2].set(jnp.sin(position * div_term))
    pe = pe.at[:, 1::2].set(jnp.cos(position * div_term))
    return pe  # (max_len, d_model); (D, L) layout handled in the wrapper


def make_conv_params(key, c_in, d_model, kernel_size=3):
    kw, kb = jax.random.split(key)
    fan_in = c_in * kernel_size
    gain = math.sqrt(2.0 / (1.0 + 0.01 ** 2))          # kaiming_normal, leaky_relu
    std = gain / math.sqrt(fan_in)
    weight = std * jax.random.normal(kw, (d_model, c_in, kernel_size), dtype=jnp.float32)
    bound = 1.0 / math.sqrt(fan_in)                    # default Conv1d bias init
    bias = jax.random.uniform(kb, (d_model,), minval=-bound, maxval=bound, dtype=jnp.float32)
    return weight, bias


# ---------------------------------------------------------------------------
# Pure-JAX reference (correctness check only)
# ---------------------------------------------------------------------------
def reference(x_ncl, weight, bias, pe_full):
    B, C, L = x_ncl.shape
    x_pad = jnp.concatenate([x_ncl[:, :, -1:], x_ncl, x_ncl[:, :, :1]], axis=2)
    out = jax.lax.conv_general_dilated(
        x_pad, weight, window_strides=(1,), padding="VALID",
        dimension_numbers=("NCH", "OIH", "NCH"),
    )
    out = out + bias[None, :, None]
    out = out + pe_full[:L, :].T[None, :, :]
    return out


if __name__ == "__main__":
    key = jax.random.PRNGKey(0)
    k_x, k_p = jax.random.split(key)

    B, c_in, L, d_model = 2, 4, 128, 32
    x = jax.random.normal(k_x, (B, c_in, L), dtype=jnp.float32)
    weight, bias = make_conv_params(k_p, c_in, d_model)
    pe_full = make_positional_embedding(d_model, max_len=256)

    # Snap the matmul operands to bf16-representable f32 values so the kernel-vs-
    # reference comparison is insensitive to the MXU's f32 multiply-precision path
    # (products are then exact in every mode; only f32 accumulation order differs).
    x = x.astype(jnp.bfloat16).astype(jnp.float32)
    weight = weight.astype(jnp.bfloat16).astype(jnp.float32)

    out = jax.block_until_ready(data_embedding(x, weight, bias, pe_full))
    ref = jax.block_until_ready(reference(x, weight, bias, pe_full))

    assert out.shape == (B, d_model, L), out.shape
    assert jnp.allclose(out, ref, atol=2e-5, rtol=2e-5), float(jnp.max(jnp.abs(out - ref)))

    print("KERNEL_OK")
</pallas_src>

<mosaic_0001>
module attributes {stable_mosaic.version = 11 : i64} {
  func.func @_data_embedding_kernel(%arg0: i32, %arg1: memref<1x4x128xf32, #tpu.memory_space<vmem>>, %arg2: memref<32x24xf32, #tpu.memory_space<vmem>>, %arg3: memref<32x128xf32, #tpu.memory_space<vmem>>, %arg4: memref<1x32x128xf32, #tpu.memory_space<vmem>>, %arg5: memref<24x128xf32, #tpu.memory_space<vmem>>) attributes {dimension_semantics = [#tpu.dimension_semantics<parallel>], iteration_bounds = array<i64: 2>, scalar_prefetch = 0 : i64, scratch_operands = 1 : i64, tpu.core_type = #tpu.core_type<tc>, window_params = [{transform_indices = @transform_0, window_bounds = array<i64: 1, 4, 128>}, {pipeline_mode = #tpu.pipeline_mode<synchronous>, transform_indices = @transform_1, window_bounds = array<i64: 32, 24>}, {pipeline_mode = #tpu.pipeline_mode<synchronous>, transform_indices = @transform_2, window_bounds = array<i64: 32, 128>}, {transform_indices = @transform_3, window_bounds = array<i64: 1, 32, 128>}]} {
    %cst = arith.constant 0.000000e+00 : f32
    %0 = vector.broadcast %cst : f32 to vector<4x128xf32>
    %c4 = arith.constant 4 : index
    %c0 = arith.constant 0 : index
    %1 = vector.load %arg5[%c4, %c0] : memref<24x128xf32, #tpu.memory_space<vmem>>, vector<4x128xf32>
    tpu.vector_store %arg5[%c4, %c0], %0 {strides = array<i32>} : memref<24x128xf32, #tpu.memory_space<vmem>>, vector<4x128xf32>,
    %c12 = arith.constant 12 : index
    %c0_0 = arith.constant 0 : index
    %2 = vector.load %arg5[%c12, %c0_0] : memref<24x128xf32, #tpu.memory_space<vmem>>, vector<4x128xf32>
    tpu.vector_store %arg5[%c12, %c0_0], %0 {strides = array<i32>} : memref<24x128xf32, #tpu.memory_space<vmem>>, vector<4x128xf32>,
    %c20 = arith.constant 20 : index
    %c0_1 = arith.constant 0 : index
    %3 = vector.load %arg5[%c20, %c0_1] : memref<24x128xf32, #tpu.memory_space<vmem>>, vector<4x128xf32>
    tpu.vector_store %arg5[%c20, %c0_1], %0 {strides = array<i32>} : memref<24x128xf32, #tpu.memory_space<vmem>>, vector<4x128xf32>,
    %c0_2 = arith.constant 0 : index
    %c0_3 = arith.constant 0 : index
    %c0_4 = arith.constant 0 : index
    %4 = vector.load %arg1[%c0_2, %c0_3, %c0_4] : memref<1x4x128xf32, #tpu.memory_space<vmem>>, vector<1x4x128xf32>
    %5 = vector.shape_cast %4 : vector<1x4x128xf32> to vector<4x128xf32>
    %c1_i32 = arith.constant 1 : i32
    %6 = tpu.dynamic_rotate %5 by %c1_i32 dim 1 : vector<4x128xf32>, i32 -> vector<4x128xf32>
    %c0_5 = arith.constant 0 : index
    %c0_6 = arith.constant 0 : index
    %7 = vector.load %arg5[%c0_5, %c0_6] : memref<24x128xf32, #tpu.memory_space<vmem>>, vector<4x128xf32>
    tpu.vector_store %arg5[%c0_5, %c0_6], %6 {strides = array<i32>} : memref<24x128xf32, #tpu.memory_space<vmem>>, vector<4x128xf32>,
    %c8 = arith.constant 8 : index
    %c0_7 = arith.constant 0 : index
    %8 = vector.load %arg5[%c8, %c0_7] : memref<24x128xf32, #tpu.memory_space<vmem>>, vector<4x128xf32>
    tpu.vector_store %arg5[%c8, %c0_7], %5 {strides = array<i32>} : memref<24x128xf32, #tpu.memory_space<vmem>>, vector<4x128xf32>,
    %c127_i32 = arith.constant 127 : i32
    %9 = tpu.dynamic_rotate %5 by %c127_i32 dim 1 : vector<4x128xf32>, i32 -> vector<4x128xf32>
    %c16 = arith.constant 16 : index
    %c0_8 = arith.constant 0 : index
    %10 = vector.load %arg5[%c16, %c0_8] : memref<24x128xf32, #tpu.memory_space<vmem>>, vector<4x128xf32>
    tpu.vector_store %arg5[%c16, %c0_8], %9 {strides = array<i32>} : memref<24x128xf32, #tpu.memory_space<vmem>>, vector<4x128xf32>,
    %c0_9 = arith.constant 0 : index
    %c0_10 = arith.constant 0 : index
    %11 = vector.load %arg2[%c0_9, %c0_10] : memref<32x24xf32, #tpu.memory_space<vmem>>, vector<32x24xf32>
    %c0_11 = arith.constant 0 : index
    %c0_12 = arith.constant 0 : index
    %12 = vector.load %arg5[%c0_11, %c0_12] : memref<24x128xf32, #tpu.memory_space<vmem>>, vector<24x128xf32>
    %cst_13 = arith.constant dense<0.000000e+00> : vector<32x128xf32>
    %13 = tpu.matmul %11, %12, %cst_13 {dimension_numbers = #tpu.dot_dimension_numbers<[1], [0], [0], [1], [0, 0, 1, 1], [], []>} : vector<32x24xf32>, vector<24x128xf32>, vector<32x128xf32> -> vector<32x128xf32>
    %c0_14 = arith.constant 0 : index
    %c0_15 = arith.constant 0 : index
    %14 = vector.load %arg3[%c0_14, %c0_15] : memref<32x128xf32, #tpu.memory_space<vmem>>, vector<32x128xf32>
    %15 = arith.addf %13, %14 : vector<32x128xf32>
    %c0_16 = arith.constant 0 : index
    %c0_17 = arith.constant 0 : index
    %c0_18 = arith.constant 0 : index
    %16 = vector.load %arg4[%c0_16, %c0_17, %c0_18] : memref<1x32x128xf32, #tpu.memory_space<vmem>>, vector<1x32x128xf32>
    %17 = vector.shape_cast %16 : vector<1x32x128xf32> to vector<32x128xf32>
    %18 = vector.shape_cast %15 : vector<32x128xf32> to vector<1x32x128xf32>
    tpu.vector_store %arg4[%c0_16, %c0_17, %c0_18], %18 {strides = array<i32>} : memref<1x32x128xf32, #tpu.memory_space<vmem>>, vector<1x32x128xf32>,
    return
  }
  func.func @transform_0(%arg0: i32) -> (i32, i32, i32) {
    %c0_i32 = arith.constant 0 : i32
    %c0_i32_0 = arith.constant 0 : i32
    %c0_i32_1 = arith.constant 0 : i32
    return %arg0, %c0_i32, %c0_i32_0 : i32, i32, i32
  }
  func.func @transform_1(%arg0: i32) -> (i32, i32) {
    %c0_i32 = arith.constant 0 : i32
    %c0_i32_0 = arith.constant 0 : i32
    %c0_i32_1 = arith.constant 0 : i32
    return %c0_i32, %c0_i32_0 : i32, i32
  }
  func.func @transform_2(%arg0: i32) -> (i32, i32) {
    %c0_i32 = arith.constant 0 : i32
    %c0_i32_0 = arith.constant 0 : i32
    %c0_i32_1 = arith.constant 0 : i32
    return %c0_i32, %c0_i32_0 : i32, i32
  }
  func.func @transform_3(%arg0: i32) -> (i32, i32, i32) {
    %c0_i32 = arith.constant 0 : i32
    %c0_i32_0 = arith.constant 0 : i32
    %c0_i32_1 = arith.constant 0 : i32
    return %arg0, %c0_i32, %c0_i32_0 : i32, i32, i32
  }
}

</mosaic_0001>

<llo_original>
// kernel: tpu_custom_call.1
$region0: #{tpu_custom_call.1}
  #allocation0 [shape = 'u32[]', space=smem, size = 0x4, offset = 0x4, fixed_abs, tag = 'smem constant byte address 0x4 - core index']
  #allocation1 [shape = 'u32[144,128]{1,0:T(1,128)}', space=vmem, size = 0x12000, scoped, tag = 'internal scratch']
  #allocation2 [shape = 'f32[24,128]{1,0:T(8,128)}', space=vmem, size = 0x3000, scoped, tag = 'scratch operand']
  %s0 = inlined_call_operand.vmem [shape: f32[2,4,128], index: 0, kind: input, shape index: {}]
  %s1 = inlined_call_operand.vmem [shape: f32[32,24], index: 1, kind: input, shape index: {}]
  %s2 = inlined_call_operand.vmem [shape: f32[32,128], index: 2, kind: input, shape index: {}]
  %s3 = inlined_call_operand.hbm [shape: f32[2,32,128], index: 3, kind: output, shape index: {}]
  %s4 = sld [smem:[#allocation0]]
  $region45: #{tpu_custom_call.1} parent=0
    _
  %s6 = ssub.s32 1, %s4
  %s7 = scalar_select 0, %s6, %s4
  $region1: #{tpu_custom_call.1} parent=0
    #allocation3 [shape = 'u8[32768]{0}', space=vmem, size = 0x8000, scoped, tag = 'output window, operand 0']
    #allocation4 [shape = 's32[2]{0}', space=sflag, size = 0x8, scoped, tag = 'scoped memory for tpu_custom_call.1']
    %8 = vsyncpa [#allocation4], 0
    %s9 = scalar_lea.sflag [#allocation4], 1
    %10 = vsyncpa %s9, 0
    loop: start=0, step=1, limit=4
    $region2: #{tpu_custom_call.1} parent=1 // loop_pre_header
      _
    $region3: #{tpu_custom_call.1} parent=1 // loop_header
      %s12 = sphi 0, %s16
      %p13 = scmp.ge.s32.totalorder %s12, 4
      %s22 = sphi 0, %s24
      %s25 = sphi 0, %s22
      %s26 = sphi 0, %s25
      %s42 = sphi 0, %s26
      %s46 = sphi 0, %s46
      %s48 = sphi 0, %s46
      %s49 = sphi 0, %s48
      %s63 = sphi 0, %s49
      %s67 = sphi 0, %s67
      %s69 = sphi 0, %s67
      %s70 = sphi 0, %s69
      %s84 = sphi 0, %s70
      %s90 = sphi 0, %s92
      %s93 = sphi 0, %s90
      %s94 = sphi 0, %s93
      %s110 = sphi 0, %s94
    $region4: #{tpu_custom_call.1} parent=1 // loop_header_branch
      %15 = sbr.rel (%p13) target = $region8
    $region5: #{tpu_custom_call.1} parent=1 // loop_body
      %s17 = ssub.s32 %s12, 1
      %s18 = ssub.s32 %s12, 2
      %s19 = sadd.s32 %s12, 1
      %s20 = ssub.s32 %s12, %s19
      %p21 = scmp.eq.s32.totalorder %s20, 0
      %s23 = sadd.s32 %s22, 1
      %s24 = scalar_select %p21, %s22, %s23
      %p27 = pneg %p21
      %p28 = scmp.eq.s32.totalorder %s12, 1
      %p29 = por %p27, %p28
      %p30 = scmp.ne.s32.totalorder %s22, %s25
      %p31 = scmp.eq.s32.totalorder %s12, 0
      %p32 = por %p30, %p31
      %p33 = scmp.ne.s32.totalorder %s22, %s25
      %p34 = scmp.eq.s32.totalorder %s17, 1
      %p35 = por %p33, %p34
      %p36 = scmp.ne.s32.totalorder %s25, %s26
      %p37 = scmp.eq.s32.totalorder %s17, 0
      %p38 = por %p36, %p37
      %p39 = scmp.ne.s32.totalorder %s25, %s26
      %p40 = scmp.eq.s32.totalorder %s18, 1
      %p41 = por %p39, %p40
      %p43 = scmp.ne.s32.totalorder %s26, %s42
      %p44 = scmp.eq.s32.totalorder %s18, 0
      %p45 = por %p43, %p44
      %s47 = sadd.s32 %s46, 1
      %p50 = scmp.eq.s32.totalorder %s12, 1
      %p51 = scmp.ne.s32.totalorder %s46, %s48
      %p52 = scmp.eq.s32.totalorder %s12, 0
      %p53 = por %p51, %p52
      %p54 = scmp.ne.s32.totalorder %s46, %s48
      %p55 = scmp.eq.s32.totalorder %s17, 1
      %p56 = por %p54, %p55
      %p57 = scmp.ne.s32.totalorder %s48, %s49
      %p58 = scmp.eq.s32.totalorder %s17, 0
      %p59 = por %p57, %p58
      %p60 = scmp.ne.s32.totalorder %s48, %s49
      %p61 = scmp.eq.s32.totalorder %s18, 1
      %p62 = por %p60, %p61
      %p64 = scmp.ne.s32.totalorder %s49, %s63
      %p65 = scmp.eq.s32.totalorder %s18, 0
      %p66 = por %p64, %p65
      %s68 = sadd.s32 %s67, 1
      %p71 = scmp.eq.s32.totalorder %s12, 1
      %p72 = scmp.ne.s32.totalorder %s67, %s69
      %p73 = scmp.eq.s32.totalorder %s12, 0
      %p74 = por %p72, %p73
      %p75 = scmp.ne.s32.totalorder %s67, %s69
      %p76 = scmp.eq.s32.totalorder %s17, 1
      %p77 = por %p75, %p76
      %p78 = scmp.ne.s32.totalorder %s69, %s70
      %p79 = scmp.eq.s32.totalorder %s17, 0
      %p80 = por %p78, %p79
      %p81 = scmp.ne.s32.totalorder %s69, %s70
      %p82 = scmp.eq.s32.totalorder %s18, 1
      %p83 = por %p81, %p82
      %p85 = scmp.ne.s32.totalorder %s70, %s84
      %p86 = scmp.eq.s32.totalorder %s18, 0
      %p87 = por %p85, %p86
      %s88 = ssub.s32 %s12, %s19
      %p89 = scmp.eq.s32.totalorder %s88, 0
      %s91 = sadd.s32 %s90, 1
      %s92 = scalar_select %p89, %s90, %s91
      %p95 = pneg %p89
      %p96 = scmp.eq.s32.totalorder %s12, 1
      %p97 = por %p95, %p96
      %p98 = scmp.ne.s32.totalorder %s90, %s93
      %p99 = scmp.eq.s32.totalorder %s12, 0
      %p100 = por %p98, %p99
      %p101 = scmp.ne.s32.totalorder %s90, %s93
      %p102 = scmp.eq.s32.totalorder %s17, 1
      %p103 = por %p101, %p102
      %p104 = scmp.ne.s32.totalorder %s93, %s94
      %p105 = scmp.eq.s32.totalorder %s17, 0
      %p106 = por %p104, %p105
      %p107 = scmp.ne.s32.totalorder %s93, %s94
      %p108 = scmp.eq.s32.totalorder %s18, 1
      %p109 = por %p107, %p108
      %p111 = scmp.ne.s32.totalorder %s94, %s110
      %p112 = scmp.eq.s32.totalorder %s18, 0
      %p113 = por %p111, %p112
      %p114 = scmp.le.s32.totalorder 1, %s12
      %p115 = scmp.lt.s32.totalorder %s12, 3
      %p116 = pnand %p114, %p115
      %p117 = pneg %p116
      // Predicated region
      $region9: #{tpu_custom_call.1} parent=5 // pred_check
        _
      $region10: #{tpu_custom_call.1} parent=5 // pred_check_branch
        %119 = sbr.rel (%p116) target = $region12
      $region11: #{tpu_custom_call.1} parent=5 // pred_region
        %s120 = ssub.s32 %s12, 1
        // Predicated region
        $region13: #{tpu_custom_call.1} parent=11 // pred_check
          %p121 = pneg %p59
        $region14: #{tpu_custom_call.1} parent=11 // pred_check_branch
          %123 = sbr.rel (%p121) target = $region16
        $region15: #{tpu_custom_call.1} parent=11 // pred_region
          _
        $region16: #{tpu_custom_call.1} parent=11 // pred_fallthru
          _
        // Predicated region
        $region17: #{tpu_custom_call.1} parent=11 // pred_check
          %p124 = pneg %p80
        $region18: #{tpu_custom_call.1} parent=11 // pred_check_branch
          %126 = sbr.rel (%p124) target = $region20
        $region19: #{tpu_custom_call.1} parent=11 // pred_region
          _
        $region20: #{tpu_custom_call.1} parent=11 // pred_fallthru
          _
      $region12: #{tpu_custom_call.1} parent=5 // pred_fallthru
        _
      %p127 = scmp.lt.s32.totalorder %s12, 2
      // Predicated region
      $region21: #{tpu_custom_call.1} parent=5 // pred_check
        %p128 = pneg %p127
      $region22: #{tpu_custom_call.1} parent=5 // pred_check_branch
        %130 = sbr.rel (%p128) target = $region24
      $region23: #{tpu_custom_call.1} parent=5 // pred_region
        // Predicated region
        $region25: #{tpu_custom_call.1} parent=23 // pred_check
          %p131 = pneg %p32
        $region26: #{tpu_custom_call.1} parent=23 // pred_check_branch
          %133 = sbr.rel (%p131) target = $region28
        $region27: #{tpu_custom_call.1} parent=23 // pred_region
          %p134 = scmp.lt.s32.totalorder %s12, 1
          %s135 = scalar_select %p134, %s12, 1
          %s136 = smul.addr %s135, 4
          %s137 = scalar_lea.vmem %s0, %s136
        $region28: #{tpu_custom_call.1} parent=23 // pred_fallthru
          _
      $region24: #{tpu_custom_call.1} parent=5 // pred_fallthru
        _
      %p138 = scmp.le.s32.totalorder 1, %s12
      %p139 = scmp.lt.s32.totalorder %s12, 3
      %p140 = pnand %p138, %p139
      %p141 = pneg %p140
      // Predicated region
      $region29: #{tpu_custom_call.1} parent=5 // pred_check
        _
      $region30: #{tpu_custom_call.1} parent=5 // pred_check_branch
        %143 = sbr.rel (%p140) target = $region32
      $region31: #{tpu_custom_call.1} parent=5 // pred_region
        %s144 = ssub.s32 %s12, 1
        %p145 = scmp.lt.s32.totalorder %s17, 1
        %s146 = scalar_select %p145, %s17, 1
        %s147 = smul.addr %s146, 4
        %s148 = scalar_lea.vmem %s0, %s147
        %p149 = pneg %p38
        %p150 = pneg %p35
        %p151 = pneg %p59
        %p152 = pneg %p56
        %p153 = pneg %p80
        %p154 = pneg %p77
        %p155 = pneg %p106
        %p156 = pneg %p103
        %s157 = sand.u32 %s93, 1
        %s158 = scalar_lea.sflag [#allocation4], %s157
        %s159 = sand.u32 %s93, 1
        %s160 = smul.addr %s159, 32
        %s161 = scalar_lea.vmem [#allocation3], %s160
        %p162 = scmp.lt.s32.totalorder %s17, 1
        %s163 = scalar_select %p162, %s17, 1
        %s164 = smul.addr %s163, 4
        %s165 = scalar_lea.vmem %s0, %s164
        %166 = vst [vmem:[#allocation2 + $0x4] sm:$0xf] 0.0
        %167 = vst [vmem:[#allocation2 + $0xc] sm:$0xf] 0.0
        %168 = vst [vmem:[#allocation2 + $0x14] sm:$0xf] 0.0
        %v169 = vld [vmem:[%s165] sm:$0xf]
        %170 = vrot.lane.b32.xlu0 %v169, 1
        %v171 = vpop.permute.xlu0 %170
        %172 = vst [vmem:[#allocation2] sm:$0xf] %v171
        %173 = vst [vmem:[#allocation2 + $0x8] sm:$0xf] %v169
        %174 = vrot.lane.b32.xlu0 %v169, 127
        %v175 = vpop.permute.xlu0 %174
        %176 = vst [vmem:[#allocation2 + $0x10] sm:$0xf] %v175
        %v177 = vld [vmem:[%s1] sm:$0xff]
        %v178 = vld [vmem:[%s1 + $0x8] sm:$0xff]
        %v179 = vld [vmem:[%s1 + $0x10] sm:$0xff]
        %v180 = vld [vmem:[%s1 + $0x18] sm:$0xff]
        %v181 = vld [vmem:[#allocation2] sm:$0xff]
        %v182 = vld [vmem:[#allocation2 + $0x8] sm:$0xff]
        %v183 = vld [vmem:[#allocation2 + $0x10] sm:$0xff]
        %v184 = vld [vmem:[%s2] sm:$0xff]
        %v185 = vld [vmem:[%s2 + $0x8] sm:$0xff]
        %v186 = vld [vmem:[%s2 + $0x10] sm:$0xff]
        %v187 = vld [vmem:[%s2 + $0x18] sm:$0xff]
        %vm188 = vcmask 195584
        %v190 = vsel %vm188, %v177, 0
        %v193 = vsel %vm188, %v178, 0
        %v196 = vsel %vm188, %v179, 0
        %v199 = vsel %vm188, %v180, 0
        %201 = vmatprep.subr.mxu0 0.0
        %202 = vmatpush1.msra.mxu0 %v181
        %203 = vmatprep.subr.mxu0 0.0
        %204 = vmatpush1.msra.mxu0 %v182
        %205 = vmatprep.subr.mxu0 0.0
        %206 = vmatpush1.msra.mxu0 %v183
        %207 = vmatprep.subr.mxu0 0.0
        %208 = vmatpush1.msra.mxu0 0.0
        %209 = vmatprep.subr.mxu0 0.0
        %210 = vmatpush1.msra.mxu0 0.0
        %211 = vmatprep.subr.mxu0 0.0
        %212 = vmatpush1.msra.mxu0 0.0
        %213 = vmatprep.subr.mxu0 0.0
        %214 = vmatpush1.msra.mxu0 0.0
        %215 = vmatprep.subr.mxu0 0.0
        %216 = vmatpush1.msra.mxu0 0.0
        %217 = vmatprep.subr.mxu0 0.0
        %218 = vmatpush1.msra.mxu0 0.0
        %219 = vmatprep.subr.mxu0 0.0
        %220 = vmatpush1.msra.mxu0 0.0
        %221 = vmatprep.subr.mxu0 0.0
        %222 = vmatpush1.msra.mxu0 0.0
        %223 = vmatprep.subr.mxu0 0.0
        %224 = vmatpush1.msra.mxu0 0.0
        %225 = vmatprep.subr.mxu0 0.0
        %226 = vmatpush1.msra.mxu0 0.0
        %227 = vmatprep.subr.mxu0 0.0
        %228 = vmatpush1.msra.mxu0 0.0
        %229 = vmatprep.subr.mxu0 0.0
        %230 = vmatpush1.msra.mxu0 0.0
        %231 = vmatprep.subr.mxu0 0.0
        %232 = vmatpush1.msra.mxu0 0.0
        %233 = vmatprep.subr.mxu0 0.0
        %234 = vmatpush1.msra.mxu0 0.0
        %235 = vmatprep.subr.mxu0 0.0
        %236 = vmatpush1.msra.mxu0 0.0
        %237 = vmatprep.subr.mxu0 0.0
        %238 = vmatpush1.msra.mxu0 0.0
        %239 = vmatprep.subr.mxu0 0.0
        %240 = vmatpush1.msra.mxu0 0.0
        %241 = vmatprep.subr.mxu0 0.0
        %242 = vmatpush1.msra.mxu0 0.0
        %243 = vmatprep.subr.mxu0 0.0
        %244 = vmatpush1.msra.mxu0 0.0
        %245 = vmatprep.subr.mxu0 0.0
        %246 = vmatpush1.msra.mxu0 0.0
        %247 = vmatprep.subr.mxu0 0.0
        %248 = vmatpush1.msra.mxu0 0.0
        %249 = vmatprep.subr.mxu0 0.0
        %250 = vmatpush1.msra.mxu0 0.0
        %251 = vmatprep.subr.mxu0 0.0
        %252 = vmatpush1.msra.mxu0 0.0
        %253 = vmatprep.subr.mxu0 0.0
        %254 = vmatpush1.msra.mxu0 0.0
        %255 = vmatprep.subr.mxu0 0.0
        %256 = vmatpush1.msra.mxu0 0.0
        %257 = vmatprep.subr.mxu0 0.0
        %258 = vmatpush1.msra.mxu0 0.0
        %259 = vmatprep.subr.mxu0 0.0
        %260 = vmatpush1.msra.mxu0 0.0
        %261 = vmatprep.subr.mxu0 0.0
        %262 = vmatpush1.msra.mxu0 0.0
        %263 = vmatprep.subr.mxu0 0.0
        %264 = vmatpush1.msra.mxu0 0.0
        %265 = vmatprep.mubr.f32.mxu0 0.0
        %266 = vmatmul.mubr.f32.gmra.mrb[0].mxu0 %v190
        %v267 = vpop.f32.mrb[0].mxu0
        %v268 = vadd.f32 %v184, %v267
        %v269 = vpop.f32.mrb[0].mxu0
        %270 = vmatprep.mubr.f32.mxu0 0.0
        %271 = vmatmul.mubr.f32.gmra.mrb[0].mxu0 %v193
        %v272 = vpop.f32.mrb[0].mxu0
        %v273 = vadd.f32 %v185, %v272
        %v274 = vpop.f32.mrb[0].mxu0
        %275 = vmatprep.mubr.f32.mxu0 0.0
        %276 = vmatmul.mubr.f32.gmra.mrb[0].mxu0 %v196
        %v277 = vpop.f32.mrb[0].mxu0
        %v278 = vadd.f32 %v186, %v277
        %v279 = vpop.f32.mrb[0].mxu0
        %280 = vmatprep.mubr.f32.mxu0 0.0
        %281 = vmatmul.mubr.f32.gmra.mrb[0].mxu0 %v199
        %v282 = vpop.f32.mrb[0].mxu0
        %v283 = vadd.f32 %v187, %v282
        %v284 = vpop.f32.mrb[0].mxu0
        %285 = vdwg.mxu0
        %286 = vst [vmem:[%s161] sm:$0xff] %v268
        %287 = vst [vmem:[%s161 + $0x8] sm:$0xff] %v273
        %288 = vst [vmem:[%s161 + $0x10] sm:$0xff] %v278
        %289 = vst [vmem:[%s161 + $0x18] sm:$0xff] %v283
        %s290 = sand.u32 %s93, 1
        %s291 = scalar_lea.sflag [#allocation4], %s290
        %s292 = sand.u32 %s93, 1
        %s293 = smul.addr %s292, 32
        %s294 = scalar_lea.vmem [#allocation3], %s293
        // Predicated region
        $region33: #{tpu_custom_call.1} parent=31 // pred_check
          %p295 = pneg %p103
        $region34: #{tpu_custom_call.1} parent=31 // pred_check_branch
          %297 = sbr.rel (%p295) target = $region36
        $region35: #{tpu_custom_call.1} parent=31 // pred_region
          %s299 = ssub.s32 512, 512
          %300 = vsyncadd %s291, %s299
          %s301 = smul.addr %s17, 4
          %s302 = smul.addr %s301, 128
          %s303 = scalar_lea.hbm %s3, %s302
          %s304 = sshll.u32 %s294, 4
          %s305 = int_to_ptr.vmem [resolvable:$true] %s304
          %310 = dma.vmem_to_hbm [thread:$0]  %s305, 512, %s303, %s291, 128, 128, 8
        $region36: #{tpu_custom_call.1} parent=31 // pred_fallthru
          _
      $region32: #{tpu_custom_call.1} parent=5 // pred_fallthru
        _
      %p311 = scmp.le.s32.totalorder 2, %s12
      // Predicated region
      $region37: #{tpu_custom_call.1} parent=5 // pred_check
        %p312 = pneg %p311
      $region38: #{tpu_custom_call.1} parent=5 // pred_check_branch
        %314 = sbr.rel (%p312) target = $region40
      $region39: #{tpu_custom_call.1} parent=5 // pred_region
        %s315 = ssub.s32 %s12, 2
        // Predicated region
        $region41: #{tpu_custom_call.1} parent=39 // pred_check
          %p316 = pneg %p109
        $region42: #{tpu_custom_call.1} parent=39 // pred_check_branch
          %318 = sbr.rel (%p316) target = $region44
        $region43: #{tpu_custom_call.1} parent=39 // pred_region
          %s319 = sand.u32 %s94, 1
          %s320 = scalar_lea.sflag [#allocation4], %s319
          %s321 = sand.u32 %s94, 1
          %s322 = smul.addr %s321, 32
          %s323 = scalar_lea.vmem [#allocation3], %s322
          %324 = dma.done %s320, 512
        $region44: #{tpu_custom_call.1} parent=39 // pred_fallthru
          _
      $region40: #{tpu_custom_call.1} parent=5 // pred_fallthru
        _
    $region6: #{tpu_custom_call.1} parent=1 // loop_footer
      %s16 = sadd.s32 1, %s12
    $region7: #{tpu_custom_call.1} parent=1 // loop_footer_branch
      %11 = sbr.rel target = $region3
    $region8: #{tpu_custom_call.1} parent=1 // loop_exit
      _
    %325 = vsyncpa [#allocation4], 1
    %s326 = scalar_lea.sflag [#allocation4], 1
    %327 = vsyncpa %s326, 1

</llo_original>
